<compile_context>
chip_gen: v7x
topology: tpu7x:2x2x1
jax: 0.10.0
libtpu: 0.0.40
codegen_flags: <defaults>
</compile_context>

<pallas_src>
import warnings
import functools
from math import ceil

import jax
import jax.numpy as jnp
from jax.experimental import pallas as pl
from jax.experimental.pallas import tpu as pltpu

RESOLUTION_LEVELS = 10


# ----------------------------------------------------------------------------
# Shape helper functions — direct ports of the PyTorch reference code
# ----------------------------------------------------------------------------
def _check_resolution(shape_constraints, resolution_level):
    if resolution_level is None:
        resolution_level = RESOLUTION_LEVELS
    pixel_bounds = sorted(shape_constraints['pixels_bounds_ori'])
    pixel_range = pixel_bounds[-1] - pixel_bounds[0]
    clipped = min(max(resolution_level, 0), RESOLUTION_LEVELS)
    if clipped != resolution_level:
        v = pixel_bounds[0] + ceil(pixel_range * clipped / RESOLUTION_LEVELS)
        shape_constraints['pixels_bounds'] = [v, v]
    return shape_constraints


def _check_ratio(image_ratio, ratio_bounds):
    ratio_bounds = sorted(ratio_bounds)
    if ratio_bounds is not None and (image_ratio < ratio_bounds[0] or image_ratio > ratio_bounds[1]):
        warnings.warn(
            f'Input image ratio ({image_ratio:.3f}) is out of training distribution: {ratio_bounds}.')


def _get_closes_num_pixels(image_shape, pixels_bounds):
    h, w = image_shape
    num_pixels = h * w
    pixels_bounds = sorted(pixels_bounds)
    num_pixels = max(min(num_pixels, pixels_bounds[1]), pixels_bounds[0])
    return num_pixels


def _shapes(image_shape, shape_constraints):
    h, w = image_shape
    image_ratio = w / h
    _check_ratio(image_ratio, shape_constraints['ratio_bounds'])
    num_pixels = _get_closes_num_pixels(
        (h / shape_constraints['patch_size'], w / shape_constraints['patch_size']),
        shape_constraints['pixels_bounds'])
    h = ceil((num_pixels / image_ratio) ** 0.5 - 0.5)
    w = ceil(h * image_ratio - 0.5)
    ratio = h / image_shape[0] * shape_constraints['patch_size']
    return ((h * shape_constraints['patch_size'], w * shape_constraints['patch_size']), ratio)


def _round_up(x, m):
    return ((x + m - 1) // m) * m


def _tp_cap():
    """Generation-aware token-tile ceiling (rows per grid step)."""
    try:
        info = pltpu.get_tpu_info()
        vmem = int(getattr(info, 'vmem_capacity_bytes', 0) or 0)
        if vmem >= 128 * 1024 * 1024:      # v5e / v6e: 128 MiB physical VMEM
            return 2048
    except Exception:
        pass
    return 1024                            # v7x (64 MiB physical) / unknown


# ----------------------------------------------------------------------------
# Fused Pallas kernels: patch-embed + fused head matmul + shared-exp epilogue
# ----------------------------------------------------------------------------
def _tokens_and_pool(p_ref, wp_ref, ts_ref):
    # (tp, Kp)bf16 @ (Kp, Dp)bf16 -> (tp, Dp)f32 ; ones-column carries the bias
    tokens = jnp.dot(p_ref[...], wp_ref[...], preferred_element_type=jnp.float32)
    tp, dp = tokens.shape
    # camera pool: per-tile (8, Dp) partial sums (zero-padded rows contribute 0)
    ts_ref[0] = tokens.reshape(tp // 8, 8, dp).sum(axis=0)
    return tokens.astype(jnp.bfloat16)


def _depth_conf_kernel(p_ref, wp_ref, wh_ref, d_ref, c_ref, ts_ref, *,
                       inv_scaling, np_out):
    tok = _tokens_and_pool(p_ref, wp_ref, ts_ref)
    # single fused head matmul: (tp, Dp) @ (Dp, 2*Np) -> [depth | conf] logits
    logits = jnp.dot(tok, wh_ref[...], preferred_element_type=jnp.float32)
    e = jnp.exp(-logits)                            # one shared EUP stream
    d_ref[...] = e[:, :np_out] * inv_scaling        # 1 / (exp(d) * scaling)
    c_ref[...] = pl.reciprocal(1.0 + e[:, np_out:], approx=True).astype(c_ref.dtype)


def _depth_only_kernel(p_ref, wp_ref, wh_ref, d_ref, ts_ref, *, inv_scaling):
    tok = _tokens_and_pool(p_ref, wp_ref, ts_ref)
    logits = jnp.dot(tok, wh_ref[...], preferred_element_type=jnp.float32)
    d_ref[...] = jnp.exp(-logits) * inv_scaling


def _fused_encode_decode(patches, w_patch, w_head, tp, inv_scaling, with_conf):
    M, Kp = patches.shape
    Dp = w_patch.shape[1]
    Hw = w_head.shape[1]                       # Np (depth only) or 2*Np (fused)
    Np = Hw // 2 if with_conf else Hw
    num_tiles = M // tp

    flops = 2 * M * Kp * Dp + 2 * M * Dp * Hw
    transcendentals = M * Hw
    bytes_accessed = (patches.size * 2 + w_patch.size * 2 + w_head.size * 2
                      + M * Np * 4 + (M * Np * 2 if with_conf else 0)
                      + num_tiles * 8 * Dp * 4)
    cost = pl.CostEstimate(flops=flops, transcendentals=transcendentals,
                           bytes_accessed=bytes_accessed)

    in_specs = [
        pl.BlockSpec((tp, Kp), lambda i: (i, 0)),      # token-tile of patch rows
        pl.BlockSpec((Kp, Dp), lambda i: (0, 0)),      # resident patch-embed weight
        pl.BlockSpec((Dp, Hw), lambda i: (0, 0)),      # resident fused head weight
    ]
    d_shape = jax.ShapeDtypeStruct((M, Np), jnp.float32)
    d_spec = pl.BlockSpec((tp, Np), lambda i: (i, 0))
    ts_shape = jax.ShapeDtypeStruct((num_tiles, 8, Dp), jnp.float32)
    ts_spec = pl.BlockSpec((1, 8, Dp), lambda i: (i, 0, 0))

    compiler_kwargs = dict(dimension_semantics=("parallel",))
    if tp >= 2048:                       # only reachable on v5e/v6e (128 MiB VMEM)
        compiler_kwargs['vmem_limit_bytes'] = 64 << 20

    if with_conf:
        kernel = functools.partial(_depth_conf_kernel,
                                   inv_scaling=inv_scaling, np_out=Np)
        out_shape = (d_shape,
                     jax.ShapeDtypeStruct((M, Np), jnp.bfloat16),  # bf16 conf store
                     ts_shape)
        out_specs = (d_spec, pl.BlockSpec((tp, Np), lambda i: (i, 0)), ts_spec)
    else:
        kernel = functools.partial(_depth_only_kernel, inv_scaling=inv_scaling)
        out_shape = (d_shape, ts_shape)
        out_specs = (d_spec, ts_spec)

    return pl.pallas_call(
        kernel,
        out_shape=out_shape,
        grid=(num_tiles,),
        in_specs=in_specs,
        out_specs=out_specs,
        compiler_params=pltpu.CompilerParams(**compiler_kwargs),
        cost_estimate=cost,
    )(patches, w_patch, w_head)


# ----------------------------------------------------------------------------
# Jitted numeric pipeline (resize / patchify / kernel / unpatchify / postprocess)
# ----------------------------------------------------------------------------
@functools.partial(jax.jit, static_argnames=(
    'patch_size', 'resized_hw', 'out_hw', 'ratio', 'inv_scaling', 'tp_cap', 'with_conf'))
def _unidepth_pipeline(rgbs, w_patch, w_head, w_cam, *, patch_size, resized_hw,
                       out_hw, ratio, inv_scaling, tp_cap, with_conf):
    n, c, _, _ = rgbs.shape
    h, w = resized_hw
    p = patch_size

    # ImageNet normalization is folded into w_patch (exact: antialiased
    # bilinear resize weights sum to 1, so the per-channel affine commutes).
    # TODO(synk): torch F.interpolate(bilinear, antialias=True) tap weights
    # differ slightly from jax.image.resize(antialias=True); semantics match.
    x = jax.image.resize(rgbs, (n, c, h, w), method='bilinear', antialias=True)

    hp, wp = h // p, w // p
    P = hp * wp
    patch_dim = c * p * p
    Kp = w_patch.shape[0]

    # patchify + ones-column (bias carrier) + pad + bf16 cast — fused by XLA
    patches = x.reshape(n, c, hp, p, wp, p)
    patches = jnp.transpose(patches, (0, 2, 4, 1, 3, 5)).reshape(n, P, patch_dim)
    patches = jnp.concatenate([patches, jnp.ones((n, P, 1), patches.dtype)], axis=-1)

    # bf16 sublane tile is (16,128): round the tile to 16 rows and take the
    # biggest tile under the generation-aware cap; per-image padding is a
    # multiple of tp, so after flattening the batch into the row axis a tile
    # never straddles two images (keeps the camera pooling per-image exact).
    P16 = _round_up(P, 16)
    tp = min(P16, tp_cap)
    P_pad = _round_up(P, tp)
    patches = jnp.pad(patches, ((0, 0), (0, P_pad - P), (0, Kp - (patch_dim + 1))))
    patches = patches.astype(jnp.bfloat16).reshape(n * P_pad, Kp)

    outs = _fused_encode_decode(patches, w_patch, w_head, tp, inv_scaling, with_conf)
    if with_conf:
        inv_depth_tok, conf_tok, tok_sum = outs
    else:
        inv_depth_tok, tok_sum = outs
        conf_tok = None

    pp = p * p

    def unpatchify(y):
        y = y.reshape(n, P_pad, -1)[:, :P, :pp].reshape(n, hp, wp, p, p)
        return jnp.transpose(y, (0, 1, 3, 2, 4)).reshape(n, 1, hp * p, wp * p)

    inv_depth = unpatchify(inv_depth_tok)           # already 1 / (depth * scaling)

    # camera head: per-tile pool partials -> per-image mean -> (fx, fy, cx, cy)
    tiles_per_image = P_pad // tp
    Dp = tok_sum.shape[-1]
    pooled = tok_sum.reshape(n, tiles_per_image * 8, Dp).sum(axis=1) / float(P)
    cam = pooled[:, :w_cam.shape[0]] @ w_cam                      # (n, 4), tiny
    fx = jnp.exp(cam[:, 0]) * float(w)
    fy = jnp.exp(cam[:, 1]) * float(h)
    cx = jax.nn.sigmoid(cam[:, 2]) * float(w)
    cy = jax.nn.sigmoid(cam[:, 3]) * float(h)
    zeros = jnp.zeros_like(fx)
    ones = jnp.ones_like(fx)
    K = jnp.stack([
        jnp.stack([fx, zeros, cx], axis=-1),
        jnp.stack([zeros, fy, cy], axis=-1),
        jnp.stack([zeros, zeros, ones], axis=-1)], axis=1)        # (n, 3, 3)
    K = K.at[:, 0, 0].divide(ratio)
    K = K.at[:, 1, 1].divide(ratio)
    K = K.at[:, 0, 2].divide(ratio)
    K = K.at[:, 1, 2].divide(ratio)

    # postprocess back to the original resolution
    Ho, Wo = out_hw
    # TODO(synk): torch 'nearest-exact' vs jax 'nearest' half-pixel conventions
    # differ at boundaries; 'nearest' (selection) keeps the inv-scale fold exact.
    inv_depth = jax.image.resize(inv_depth, (n, 1, Ho, Wo), method='nearest')

    confidence = None
    if with_conf:
        confidence = unpatchify(conf_tok.astype(jnp.float32))
        confidence = jax.image.resize(confidence, (n, 1, Ho, Wo),
                                      method='bilinear', antialias=True)
    return inv_depth, confidence, K


# ----------------------------------------------------------------------------
# Wrapper module
# ----------------------------------------------------------------------------
class UniDepthV2PallasWrapper:
    PATCH_SIZE = 14
    EMBED_DIM = 64

    def __init__(self, conf, key):
        self.scaling = float(conf.get('scaling', 0.1))
        # Confidence is computed by the reference decoder but never returned by
        # forward(); gate its matmul/store/resize off when callers don't need it.
        self.compute_confidence = bool(conf.get('compute_confidence', True))
        p = self.PATCH_SIZE
        d = self.EMBED_DIM
        self.patch_size = p
        # Small synthetic shape constraints so tiny test images stay tiny.
        self.shape_constraints = {
            'pixels_bounds': [4, 16],
            'pixels_bounds_ori': [4, 16],
            'patch_size': p,
            'ratio_bounds': [0.5, 2.0],
        }
        self.resolution_level = RESOLUTION_LEVELS
        self.interpolation_mode = 'nearest'
        self._tp_cap = _tp_cap()

        # TODO(synk): pretrained torch.hub UniDepth pixel_encoder/pixel_decoder
        # (DINO ViT + decoder, feature slicing/stacking, camera/global tokens)
        # cannot be reproduced without the checkpoint; replaced with a
        # deterministic synthetic patch-embed + linear heads below.
        patch_dim = 3 * p * p
        k1, k2, k3, k4 = jax.random.split(key, 4)
        w_patch = (0.02 * jax.random.normal(k1, (patch_dim, d))).astype(jnp.float32)
        w_depth = (0.02 * jax.random.normal(k2, (d, p * p))).astype(jnp.float32)
        w_conf = (0.02 * jax.random.normal(k3, (d, p * p))).astype(jnp.float32)
        self.w_cam = (0.02 * jax.random.normal(k4, (d, 4))).astype(jnp.float32)

        # ---- fold ImageNet normalization into the patch-embed weights -------
        mean = jnp.array([0.485, 0.456, 0.406], jnp.float32)
        std = jnp.array([0.229, 0.224, 0.225], jnp.float32)
        ch = jnp.repeat(jnp.arange(3), p * p)            # channel of each patch feature
        w_scaled = w_patch * (1.0 / std)[ch][:, None]    # W' = W / std_c
        bias = -((mean / std)[ch][None, :] @ w_patch)    # (1, d): -(m/s) @ W

        # ---- pad to MXU / lane-friendly shapes (zero padding is exact) ------
        Kp = _round_up(patch_dim + 1, 128)   # +1: ones column carries the bias row
        Dp = _round_up(d, 128)
        Np = _round_up(p * p, 128)           # 196 -> 256 lane-dense head output
        wp_pad = jnp.zeros((Kp, Dp), jnp.float32)
        wp_pad = wp_pad.at[:patch_dim, :d].set(w_scaled)
        wp_pad = wp_pad.at[patch_dim, :d].set(bias[0])
        wd_pad = jnp.zeros((Dp, Np), jnp.float32).at[:d, :p * p].set(w_depth)
        wc_pad = jnp.zeros((Dp, Np), jnp.float32).at[:d, :p * p].set(w_conf)

        self.w_patch = wp_pad.astype(jnp.bfloat16)
        if self.compute_confidence:
            # fused (Dp, 2*Np) head weight -> one MXU weight-stage per tile
            self.w_head = jnp.concatenate([wd_pad, wc_pad], axis=1).astype(jnp.bfloat16)
        else:
            self.w_head = wd_pad.astype(jnp.bfloat16)

    # ---- forward (mirrors the PyTorch module) --------------------------------
    def forward(self, rgbs, return_features=False):
        n, c, H, W = rgbs.shape
        shape_constraints = _check_resolution(dict(self.shape_constraints),
                                              self.resolution_level)
        (h, w), ratio = _shapes((H, W), shape_constraints)

        inv_depth, confidence, K = _unidepth_pipeline(
            rgbs, self.w_patch, self.w_head, self.w_cam,
            patch_size=self.patch_size, resized_hw=(h, w), out_hw=(H, W),
            ratio=float(ratio), inv_scaling=float(1.0 / self.scaling),
            tp_cap=self._tp_cap, with_conf=self.compute_confidence)

        # auxiliary postprocess outputs (computed by the module but not returned)
        self._last_outs = {'confidence': confidence, 'K': K}

        if not return_features:
            return [inv_depth]
        return ([inv_depth], jnp.zeros_like(inv_depth))


# ----------------------------------------------------------------------------
if __name__ == "__main__":
    key = jax.random.PRNGKey(0)
    k_params, k_data = jax.random.split(key)

    model = UniDepthV2PallasWrapper({'scaling': 0.1}, k_params)

    # small input consistent with the module's NCHW RGB expectations
    rgbs = jax.random.uniform(k_data, (2, 3, 32, 32), dtype=jnp.float32)

    out = model.forward(rgbs, return_features=False)
    depth = jax.block_until_ready(out[0])
    assert depth.shape == (2, 1, 32, 32)
    assert bool(jnp.all(jnp.isfinite(depth)))
    assert model._last_outs['K'].shape == (2, 3, 3)
    assert model._last_outs['confidence'].shape == (2, 1, 32, 32)

    out2, feats = model.forward(rgbs, return_features=True)
    jax.block_until_ready(feats)
    assert feats.shape == (2, 1, 32, 32)

    # depth-only fast path (confidence branch gated off) must agree on depth
    model_fast = UniDepthV2PallasWrapper(
        {'scaling': 0.1, 'compute_confidence': False}, k_params)
    depth_fast = jax.block_until_ready(model_fast.forward(rgbs)[0])
    assert depth_fast.shape == (2, 1, 32, 32)
    assert bool(jnp.allclose(depth, depth_fast, atol=1e-5, rtol=1e-5))

    print("KERNEL_OK")
</pallas_src>

<mosaic_0001>
module attributes {stable_mosaic.version = 11 : i64} {
  func.func @_depth_conf_kernel(%arg0: i32, %arg1: memref<16x640xbf16, #tpu.memory_space<vmem>>, %arg2: memref<640x128xbf16, #tpu.memory_space<vmem>>, %arg3: memref<128x512xbf16, #tpu.memory_space<vmem>>, %arg4: memref<16x256xf32, #tpu.memory_space<vmem>>, %arg5: memref<16x256xbf16, #tpu.memory_space<vmem>>, %arg6: memref<1x8x128xf32, #tpu.memory_space<vmem>>) attributes {dimension_semantics = [#tpu.dimension_semantics<parallel>], iteration_bounds = array<i64: 2>, scalar_prefetch = 0 : i64, scratch_operands = 0 : i64, tpu.core_type = #tpu.core_type<tc>, window_params = [{transform_indices = @transform_0, window_bounds = array<i64: 16, 640>}, {pipeline_mode = #tpu.pipeline_mode<synchronous>, transform_indices = @transform_1, window_bounds = array<i64: 640, 128>}, {pipeline_mode = #tpu.pipeline_mode<synchronous>, transform_indices = @transform_2, window_bounds = array<i64: 128, 512>}, {transform_indices = @transform_3, window_bounds = array<i64: 16, 256>}, {transform_indices = @transform_4, window_bounds = array<i64: 16, 256>}, {transform_indices = @transform_5, window_bounds = array<i64: 1, 8, 128>}]} {
    %c0 = arith.constant 0 : index
    %c0_0 = arith.constant 0 : index
    %0 = vector.load %arg1[%c0, %c0_0] : memref<16x640xbf16, #tpu.memory_space<vmem>>, vector<16x640xbf16>
    %c0_1 = arith.constant 0 : index
    %c0_2 = arith.constant 0 : index
    %1 = vector.load %arg2[%c0_1, %c0_2] : memref<640x128xbf16, #tpu.memory_space<vmem>>, vector<640x128xbf16>
    %cst = arith.constant dense<0.000000e+00> : vector<16x128xf32>
    %2 = tpu.matmul %0, %1, %cst {dimension_numbers = #tpu.dot_dimension_numbers<[1], [0], [0], [1], [0, 0, 1, 1], [], []>} : vector<16x640xbf16>, vector<640x128xbf16>, vector<16x128xf32> -> vector<16x128xf32>
    %3 = vector.shape_cast %2 : vector<16x128xf32> to vector<2x8x128xf32>
    %cst_3 = arith.constant dense<0.000000e+00> : vector<8x128xf32>
    %4 = vector.multi_reduction <add>, %3, %cst_3 [0] : vector<2x8x128xf32> to vector<8x128xf32>
    %c0_4 = arith.constant 0 : index
    %c0_5 = arith.constant 0 : index
    %c0_6 = arith.constant 0 : index
    %5 = vector.load %arg6[%c0_4, %c0_5, %c0_6] : memref<1x8x128xf32, #tpu.memory_space<vmem>>, vector<1x8x128xf32>
    %6 = vector.shape_cast %5 : vector<1x8x128xf32> to vector<8x128xf32>
    %7 = vector.shape_cast %4 : vector<8x128xf32> to vector<1x8x128xf32>
    tpu.vector_store %arg6[%c0_4, %c0_5, %c0_6], %7 {strides = array<i32>} : memref<1x8x128xf32, #tpu.memory_space<vmem>>, vector<1x8x128xf32>,
    %8 = arith.truncf %2 : vector<16x128xf32> to vector<16x128xbf16>
    %c0_7 = arith.constant 0 : index
    %c0_8 = arith.constant 0 : index
    %9 = vector.load %arg3[%c0_7, %c0_8] : memref<128x512xbf16, #tpu.memory_space<vmem>>, vector<128x512xbf16>
    %cst_9 = arith.constant dense<0.000000e+00> : vector<16x512xf32>
    %10 = tpu.matmul %8, %9, %cst_9 {dimension_numbers = #tpu.dot_dimension_numbers<[1], [0], [0], [1], [0, 0, 1, 1], [], []>} : vector<16x128xbf16>, vector<128x512xbf16>, vector<16x512xf32> -> vector<16x512xf32>
    %cst_10 = arith.constant 0.000000e+00 : f32
    %11 = vector.broadcast %cst_10 : f32 to vector<16x512xf32>
    %12 = arith.subf %11, %10 : vector<16x512xf32>
    %13 = math.exp %12 : vector<16x512xf32>
    %14 = vector.extract_strided_slice %13 {offsets = [0, 0], sizes = [16, 256], strides = [1, 1]} : vector<16x512xf32> to vector<16x256xf32>
    %cst_11 = arith.constant 1.000000e+01 : f32
    %15 = vector.broadcast %cst_11 : f32 to vector<16x256xf32>
    %16 = arith.mulf %14, %15 : vector<16x256xf32>
    %c0_12 = arith.constant 0 : index
    %c0_13 = arith.constant 0 : index
    %17 = vector.load %arg4[%c0_12, %c0_13] : memref<16x256xf32, #tpu.memory_space<vmem>>, vector<16x256xf32>
    tpu.vector_store %arg4[%c0_12, %c0_13], %16 {strides = array<i32>} : memref<16x256xf32, #tpu.memory_space<vmem>>, vector<16x256xf32>,
    %18 = vector.extract_strided_slice %13 {offsets = [0, 256], sizes = [16, 256], strides = [1, 1]} : vector<16x512xf32> to vector<16x256xf32>
    %cst_14 = arith.constant 1.000000e+00 : f32
    %19 = vector.broadcast %cst_14 : f32 to vector<16x256xf32>
    %20 = arith.addf %19, %18 : vector<16x256xf32>
    %21 = tpu.reciprocal %20 {approx = true} : vector<16x256xf32> -> vector<16x256xf32>
    %22 = arith.truncf %21 : vector<16x256xf32> to vector<16x256xbf16>
    %c0_15 = arith.constant 0 : index
    %c0_16 = arith.constant 0 : index
    %23 = vector.load %arg5[%c0_15, %c0_16] : memref<16x256xbf16, #tpu.memory_space<vmem>>, vector<16x256xbf16>
    tpu.vector_store %arg5[%c0_15, %c0_16], %22 {strides = array<i32>} : memref<16x256xbf16, #tpu.memory_space<vmem>>, vector<16x256xbf16>,
    return
  }
  func.func @transform_0(%arg0: i32) -> (i32, i32) {
    %c0_i32 = arith.constant 0 : i32
    %c0_i32_0 = arith.constant 0 : i32
    return %arg0, %c0_i32 : i32, i32
  }
  func.func @transform_1(%arg0: i32) -> (i32, i32) {
    %c0_i32 = arith.constant 0 : i32
    %c0_i32_0 = arith.constant 0 : i32
    %c0_i32_1 = arith.constant 0 : i32
    return %c0_i32, %c0_i32_0 : i32, i32
  }
  func.func @transform_2(%arg0: i32) -> (i32, i32) {
    %c0_i32 = arith.constant 0 : i32
    %c0_i32_0 = arith.constant 0 : i32
    %c0_i32_1 = arith.constant 0 : i32
    return %c0_i32, %c0_i32_0 : i32, i32
  }
  func.func @transform_3(%arg0: i32) -> (i32, i32) {
    %c0_i32 = arith.constant 0 : i32
    %c0_i32_0 = arith.constant 0 : i32
    return %arg0, %c0_i32 : i32, i32
  }
  func.func @transform_4(%arg0: i32) -> (i32, i32) {
    %c0_i32 = arith.constant 0 : i32
    %c0_i32_0 = arith.constant 0 : i32
    return %arg0, %c0_i32 : i32, i32
  }
  func.func @transform_5(%arg0: i32) -> (i32, i32, i32) {
    %c0_i32 = arith.constant 0 : i32
    %c0_i32_0 = arith.constant 0 : i32
    %c0_i32_1 = arith.constant 0 : i32
    return %arg0, %c0_i32, %c0_i32_0 : i32, i32, i32
  }
}

</mosaic_0001>

<llo_original>
// kernel: _unidepth_pipeline.1
$region0: #{_unidepth_pipeline.1}
  #allocation0 [shape = 'u32[]', space=smem, size = 0x4, offset = 0x4, fixed_abs, tag = 'smem constant byte address 0x4 - core index']
  #allocation1 [shape = 'u32[144,128]{1,0:T(1,128)}', space=vmem, size = 0x12000, scoped, tag = 'internal scratch']
  %s0 = inlined_call_operand.vmem [shape: bf16[32,640], index: 0, kind: input, shape index: {}]
  %s1 = inlined_call_operand.vmem [shape: bf16[640,128], index: 1, kind: input, shape index: {}]
  %s2 = inlined_call_operand.vmem [shape: bf16[128,512], index: 2, kind: input, shape index: {}]
  %s3 = inlined_call_operand.vmem [shape: f32[32,256], index: 3, kind: output, shape index: {0}]
  %s4 = inlined_call_operand.vmem [shape: bf16[32,256], index: 4, kind: output, shape index: {1}]
  %s5 = inlined_call_operand.vmem [shape: f32[2,8,128], index: 5, kind: output, shape index: {2}]
  %6 = xla_tuple %s3, %s4, %s5
  %s7 = sld [smem:[#allocation0]]
  $region61: #{_unidepth_pipeline.1} parent=0
    _
  %s9 = ssub.s32 1, %s7
  %s10 = scalar_select 0, %s9, %s7
  loop: start=0, step=1, limit=4
  $region2: #{_unidepth_pipeline.1} parent=0 // loop_pre_header
    _
  $region3: #{_unidepth_pipeline.1} parent=0 // loop_header
    %s12 = sphi 0, %s16
    %p13 = scmp.ge.s32.totalorder %s12, 4
    %s22 = sphi 0, %s24
    %s25 = sphi 0, %s22
    %s26 = sphi 0, %s25
    %s42 = sphi 0, %s26
    %s46 = sphi 0, %s46
    %s48 = sphi 0, %s46
    %s49 = sphi 0, %s48
    %s63 = sphi 0, %s49
    %s67 = sphi 0, %s67
    %s69 = sphi 0, %s67
    %s70 = sphi 0, %s69
    %s84 = sphi 0, %s70
    %s90 = sphi 0, %s92
    %s93 = sphi 0, %s90
    %s94 = sphi 0, %s93
    %s110 = sphi 0, %s94
    %s116 = sphi 0, %s118
    %s119 = sphi 0, %s116
    %s120 = sphi 0, %s119
    %s136 = sphi 0, %s120
    %s142 = sphi 0, %s144
    %s145 = sphi 0, %s142
    %s146 = sphi 0, %s145
    %s162 = sphi 0, %s146
  $region4: #{_unidepth_pipeline.1} parent=0 // loop_header_branch
    %15 = sbr.rel (%p13) target = $region8
  $region5: #{_unidepth_pipeline.1} parent=0 // loop_body
    %s17 = ssub.s32 %s12, 1
    %s18 = ssub.s32 %s12, 2
    %s19 = sadd.s32 %s12, 1
    %s20 = ssub.s32 %s12, %s19
    %p21 = scmp.eq.s32.totalorder %s20, 0
    %s23 = sadd.s32 %s22, 1
    %s24 = scalar_select %p21, %s22, %s23
    %p27 = pneg %p21
    %p28 = scmp.eq.s32.totalorder %s12, 1
    %p29 = por %p27, %p28
    %p30 = scmp.ne.s32.totalorder %s22, %s25
    %p31 = scmp.eq.s32.totalorder %s12, 0
    %p32 = por %p30, %p31
    %p33 = scmp.ne.s32.totalorder %s22, %s25
    %p34 = scmp.eq.s32.totalorder %s17, 1
    %p35 = por %p33, %p34
    %p36 = scmp.ne.s32.totalorder %s25, %s26
    %p37 = scmp.eq.s32.totalorder %s17, 0
    %p38 = por %p36, %p37
    %p39 = scmp.ne.s32.totalorder %s25, %s26
    %p40 = scmp.eq.s32.totalorder %s18, 1
    %p41 = por %p39, %p40
    %p43 = scmp.ne.s32.totalorder %s26, %s42
    %p44 = scmp.eq.s32.totalorder %s18, 0
    %p45 = por %p43, %p44
    %s47 = sadd.s32 %s46, 1
    %p50 = scmp.eq.s32.totalorder %s12, 1
    %p51 = scmp.ne.s32.totalorder %s46, %s48
    %p52 = scmp.eq.s32.totalorder %s12, 0
    %p53 = por %p51, %p52
    %p54 = scmp.ne.s32.totalorder %s46, %s48
    %p55 = scmp.eq.s32.totalorder %s17, 1
    %p56 = por %p54, %p55
    %p57 = scmp.ne.s32.totalorder %s48, %s49
    %p58 = scmp.eq.s32.totalorder %s17, 0
    %p59 = por %p57, %p58
    %p60 = scmp.ne.s32.totalorder %s48, %s49
    %p61 = scmp.eq.s32.totalorder %s18, 1
    %p62 = por %p60, %p61
    %p64 = scmp.ne.s32.totalorder %s49, %s63
    %p65 = scmp.eq.s32.totalorder %s18, 0
    %p66 = por %p64, %p65
    %s68 = sadd.s32 %s67, 1
    %p71 = scmp.eq.s32.totalorder %s12, 1
    %p72 = scmp.ne.s32.totalorder %s67, %s69
    %p73 = scmp.eq.s32.totalorder %s12, 0
    %p74 = por %p72, %p73
    %p75 = scmp.ne.s32.totalorder %s67, %s69
    %p76 = scmp.eq.s32.totalorder %s17, 1
    %p77 = por %p75, %p76
    %p78 = scmp.ne.s32.totalorder %s69, %s70
    %p79 = scmp.eq.s32.totalorder %s17, 0
    %p80 = por %p78, %p79
    %p81 = scmp.ne.s32.totalorder %s69, %s70
    %p82 = scmp.eq.s32.totalorder %s18, 1
    %p83 = por %p81, %p82
    %p85 = scmp.ne.s32.totalorder %s70, %s84
    %p86 = scmp.eq.s32.totalorder %s18, 0
    %p87 = por %p85, %p86
    %s88 = ssub.s32 %s12, %s19
    %p89 = scmp.eq.s32.totalorder %s88, 0
    %s91 = sadd.s32 %s90, 1
    %s92 = scalar_select %p89, %s90, %s91
    %p95 = pneg %p89
    %p96 = scmp.eq.s32.totalorder %s12, 1
    %p97 = por %p95, %p96
    %p98 = scmp.ne.s32.totalorder %s90, %s93
    %p99 = scmp.eq.s32.totalorder %s12, 0
    %p100 = por %p98, %p99
    %p101 = scmp.ne.s32.totalorder %s90, %s93
    %p102 = scmp.eq.s32.totalorder %s17, 1
    %p103 = por %p101, %p102
    %p104 = scmp.ne.s32.totalorder %s93, %s94
    %p105 = scmp.eq.s32.totalorder %s17, 0
    %p106 = por %p104, %p105
    %p107 = scmp.ne.s32.totalorder %s93, %s94
    %p108 = scmp.eq.s32.totalorder %s18, 1
    %p109 = por %p107, %p108
    %p111 = scmp.ne.s32.totalorder %s94, %s110
    %p112 = scmp.eq.s32.totalorder %s18, 0
    %p113 = por %p111, %p112
    %s114 = ssub.s32 %s12, %s19
    %p115 = scmp.eq.s32.totalorder %s114, 0
    %s117 = sadd.s32 %s116, 1
    %s118 = scalar_select %p115, %s116, %s117
    %p121 = pneg %p115
    %p122 = scmp.eq.s32.totalorder %s12, 1
    %p123 = por %p121, %p122
    %p124 = scmp.ne.s32.totalorder %s116, %s119
    %p125 = scmp.eq.s32.totalorder %s12, 0
    %p126 = por %p124, %p125
    %p127 = scmp.ne.s32.totalorder %s116, %s119
    %p128 = scmp.eq.s32.totalorder %s17, 1
    %p129 = por %p127, %p128
    %p130 = scmp.ne.s32.totalorder %s119, %s120
    %p131 = scmp.eq.s32.totalorder %s17, 0
    %p132 = por %p130, %p131
    %p133 = scmp.ne.s32.totalorder %s119, %s120
    %p134 = scmp.eq.s32.totalorder %s18, 1
    %p135 = por %p133, %p134
    %p137 = scmp.ne.s32.totalorder %s120, %s136
    %p138 = scmp.eq.s32.totalorder %s18, 0
    %p139 = por %p137, %p138
    %s140 = ssub.s32 %s12, %s19
    %p141 = scmp.eq.s32.totalorder %s140, 0
    %s143 = sadd.s32 %s142, 1
    %s144 = scalar_select %p141, %s142, %s143
    %p147 = pneg %p141
    %p148 = scmp.eq.s32.totalorder %s12, 1
    %p149 = por %p147, %p148
    %p150 = scmp.ne.s32.totalorder %s142, %s145
    %p151 = scmp.eq.s32.totalorder %s12, 0
    %p152 = por %p150, %p151
    %p153 = scmp.ne.s32.totalorder %s142, %s145
    %p154 = scmp.eq.s32.totalorder %s17, 1
    %p155 = por %p153, %p154
    %p156 = scmp.ne.s32.totalorder %s145, %s146
    %p157 = scmp.eq.s32.totalorder %s17, 0
    %p158 = por %p156, %p157
    %p159 = scmp.ne.s32.totalorder %s145, %s146
    %p160 = scmp.eq.s32.totalorder %s18, 1
    %p161 = por %p159, %p160
    %p163 = scmp.ne.s32.totalorder %s146, %s162
    %p164 = scmp.eq.s32.totalorder %s18, 0
    %p165 = por %p163, %p164
    %p166 = scmp.le.s32.totalorder 1, %s12
    %p167 = scmp.lt.s32.totalorder %s12, 3
    %p168 = pnand %p166, %p167
    %p169 = pneg %p168
    // Predicated region
    $region9: #{_unidepth_pipeline.1} parent=5 // pred_check
      _
    $region10: #{_unidepth_pipeline.1} parent=5 // pred_check_branch
      %171 = sbr.rel (%p168) target = $region12
    $region11: #{_unidepth_pipeline.1} parent=5 // pred_region
      %s172 = ssub.s32 %s12, 1
      // Predicated region
      $region13: #{_unidepth_pipeline.1} parent=11 // pred_check
        %p173 = pneg %p59
      $region14: #{_unidepth_pipeline.1} parent=11 // pred_check_branch
        %175 = sbr.rel (%p173) target = $region16
      $region15: #{_unidepth_pipeline.1} parent=11 // pred_region
        _
      $region16: #{_unidepth_pipeline.1} parent=11 // pred_fallthru
        _
      // Predicated region
      $region17: #{_unidepth_pipeline.1} parent=11 // pred_check
        %p176 = pneg %p80
      $region18: #{_unidepth_pipeline.1} parent=11 // pred_check_branch
        %178 = sbr.rel (%p176) target = $region20
      $region19: #{_unidepth_pipeline.1} parent=11 // pred_region
        _
      $region20: #{_unidepth_pipeline.1} parent=11 // pred_fallthru
        _
    $region12: #{_unidepth_pipeline.1} parent=5 // pred_fallthru
      _
    %p179 = scmp.lt.s32.totalorder %s12, 2
    // Predicated region
    $region21: #{_unidepth_pipeline.1} parent=5 // pred_check
      %p180 = pneg %p179
    $region22: #{_unidepth_pipeline.1} parent=5 // pred_check_branch
      %182 = sbr.rel (%p180) target = $region24
    $region23: #{_unidepth_pipeline.1} parent=5 // pred_region
      // Predicated region
      $region25: #{_unidepth_pipeline.1} parent=23 // pred_check
        %p183 = pneg %p32
      $region26: #{_unidepth_pipeline.1} parent=23 // pred_check_branch
        %185 = sbr.rel (%p183) target = $region28
      $region27: #{_unidepth_pipeline.1} parent=23 // pred_region
        %s186 = smul.u32 2, %s12
        %p187 = scmp.lt.s32.totalorder %s186, 3
        %s188 = scalar_select %p187, %s186, 3
        %s189 = smul.addr %s188, 5
        %s190 = smul.addr %s189, 4
        %s191 = scalar_lea.vmem %s0, %s190
        %s192 = smul.u32 2, %s12
      $region28: #{_unidepth_pipeline.1} parent=23 // pred_fallthru
        _
    $region24: #{_unidepth_pipeline.1} parent=5 // pred_fallthru
      _
    %p193 = scmp.le.s32.totalorder 1, %s12
    %p194 = scmp.lt.s32.totalorder %s12, 3
    %p195 = pnand %p193, %p194
    %p196 = pneg %p195
    // Predicated region
    $region29: #{_unidepth_pipeline.1} parent=5 // pred_check
      _
    $region30: #{_unidepth_pipeline.1} parent=5 // pred_check_branch
      %198 = sbr.rel (%p195) target = $region32
    $region31: #{_unidepth_pipeline.1} parent=5 // pred_region
      %s199 = ssub.s32 %s12, 1
      %s200 = smul.u32 2, %s17
      %p201 = scmp.lt.s32.totalorder %s200, 3
      %s202 = scalar_select %p201, %s200, 3
      %s203 = smul.addr %s202, 5
      %s204 = smul.addr %s203, 4
      %s205 = scalar_lea.vmem %s0, %s204
      %p206 = pneg %p38
      %p207 = pneg %p35
      %p208 = pneg %p59
      %p209 = pneg %p56
      %p210 = pneg %p80
      %p211 = pneg %p77
      %p212 = pneg %p106
      %p213 = pneg %p103
      %s214 = smul.u32 2, %s17
      %p215 = scmp.lt.s32.totalorder %s214, 3
      %s216 = scalar_select %p215, %s214, 3
      %s217 = smul.addr %s216, 2
      %s218 = smul.addr %s217, 8
      %s219 = scalar_lea.vmem %s3, %s218
      %p220 = pneg %p132
      %p221 = pneg %p129
      %s222 = smul.u32 2, %s17
      %p223 = scmp.lt.s32.totalorder %s222, 3
      %s224 = scalar_select %p223, %s222, 3
      %s225 = smul.addr %s224, 2
      %s226 = smul.addr %s225, 4
      %s227 = scalar_lea.vmem %s4, %s226
      %p228 = pneg %p158
      %p229 = pneg %p155
      %p230 = scmp.lt.s32.totalorder %s17, 1
      %s231 = scalar_select %p230, %s17, 1
      %s232 = smul.addr %s231, 8
      %s233 = scalar_lea.vmem %s5, %s232
      %s234 = smul.u32 2, %s17
      %p235 = scmp.lt.s32.totalorder %s234, 3
      %s236 = scalar_select %p235, %s234, 3
      %s237 = smul.addr %s236, 5
      %s238 = smul.addr %s237, 4
      %s239 = scalar_lea.vmem %s0, %s238
      %s240 = smul.u32 2, %s17
      %s241 = smul.u32 2, %s17
      %p242 = scmp.lt.s32.totalorder %s241, 3
      %s243 = scalar_select %p242, %s241, 3
      %s244 = smul.addr %s243, 2
      %s245 = smul.addr %s244, 8
      %s246 = scalar_lea.vmem %s3, %s245
      %s247 = smul.u32 2, %s17
      %s248 = smul.u32 2, %s17
      %p249 = scmp.lt.s32.totalorder %s248, 3
      %s250 = scalar_select %p249, %s248, 3
      %s251 = smul.addr %s250, 2
      %s252 = smul.addr %s251, 4
      %s253 = scalar_lea.vmem %s4, %s252
      %s254 = smul.u32 2, %s17
      %p255 = scmp.lt.s32.totalorder %s17, 1
      %s256 = scalar_select %p255, %s17, 1
      %s257 = smul.addr %s256, 8
      %s258 = scalar_lea.vmem %s5, %s257
      %v260 = vld [vmem:[%s239] sm:$0xff]
      %v261 = vld [vmem:[%s239 + $0x8] sm:$0xff]
      %v262 = vld [vmem:[%s239 + $0x10] sm:$0xf]
      %v263 = vld [vmem:[%s239 + $0x14] sm:$0xff]
      %v264 = vld [vmem:[%s239 + $0x1c] sm:$0xff]
      %v265 = vld [vmem:[%s239 + $0x24] sm:$0xf]
      %v266 = vld [vmem:[%s1] sm:$0xf]
      %v267 = vld [vmem:[%s1 + $0x4] sm:$0xf]
      %v268 = vld [vmem:[%s1 + $0x8] sm:$0xf]
      %v269 = vld [vmem:[%s1 + $0xc] sm:$0xf]
      %v270 = vld [vmem:[%s1 + $0x10] sm:$0xf]
      %v271 = vld [vmem:[%s1 + $0x14] sm:$0xf]
      %v272 = vld [vmem:[%s1 + $0x18] sm:$0xf]
      %v273 = vld [vmem:[%s1 + $0x1c] sm:$0xf]
      %v274 = vld [vmem:[%s1 + $0x20] sm:$0xf]
      %v275 = vld [vmem:[%s1 + $0x24] sm:$0xf]
      %v276 = vld [vmem:[%s1 + $0x28] sm:$0xf]
      %v277 = vld [vmem:[%s1 + $0x2c] sm:$0xf]
      %v278 = vld [vmem:[%s1 + $0x30] sm:$0xf]
      %v279 = vld [vmem:[%s1 + $0x34] sm:$0xf]
      %v280 = vld [vmem:[%s1 + $0x38] sm:$0xf]
      %v281 = vld [vmem:[%s1 + $0x3c] sm:$0xf]
      %v282 = vld [vmem:[%s1 + $0x40] sm:$0xf]
      %v283 = vld [vmem:[%s1 + $0x44] sm:$0xf]
      %v284 = vld [vmem:[%s1 + $0x48] sm:$0xf]
      %v285 = vld [vmem:[%s1 + $0x4c] sm:$0xf]
      %v286 = vld [vmem:[%s1 + $0x50] sm:$0xf]
      %v287 = vld [vmem:[%s1 + $0x54] sm:$0xf]
      %v288 = vld [vmem:[%s1 + $0x58] sm:$0xf]
      %v289 = vld [vmem:[%s1 + $0x5c] sm:$0xf]
      %v290 = vld [vmem:[%s1 + $0x60] sm:$0xf]
      %v291 = vld [vmem:[%s1 + $0x64] sm:$0xf]
      %v292 = vld [vmem:[%s1 + $0x68] sm:$0xf]
      %v293 = vld [vmem:[%s1 + $0x6c] sm:$0xf]
      %v294 = vld [vmem:[%s1 + $0x70] sm:$0xf]
      %v295 = vld [vmem:[%s1 + $0x74] sm:$0xf]
      %v296 = vld [vmem:[%s1 + $0x78] sm:$0xf]
      %v297 = vld [vmem:[%s1 + $0x7c] sm:$0xf]
      %v298 = vld [vmem:[%s1 + $0x80] sm:$0xf]
      %v299 = vld [vmem:[%s1 + $0x84] sm:$0xf]
      %v300 = vld [vmem:[%s1 + $0x88] sm:$0xf]
      %v301 = vld [vmem:[%s1 + $0x8c] sm:$0xf]
      %v302 = vld [vmem:[%s1 + $0x90] sm:$0xf]
      %v303 = vld [vmem:[%s1 + $0x94] sm:$0xf]
      %v304 = vld [vmem:[%s1 + $0x98] sm:$0xf]
      %v305 = vld [vmem:[%s1 + $0x9c] sm:$0xf]
      %v306 = vld [vmem:[%s1 + $0xa0] sm:$0xf]
      %v307 = vld [vmem:[%s1 + $0xa4] sm:$0xf]
      %v308 = vld [vmem:[%s1 + $0xa8] sm:$0xf]
      %v309 = vld [vmem:[%s1 + $0xac] sm:$0xf]
      %v310 = vld [vmem:[%s1 + $0xb0] sm:$0xf]
      %v311 = vld [vmem:[%s1 + $0xb4] sm:$0xf]
      %v312 = vld [vmem:[%s1 + $0xb8] sm:$0xf]
      %v313 = vld [vmem:[%s1 + $0xbc] sm:$0xf]
      %v314 = vld [vmem:[%s1 + $0xc0] sm:$0xf]
      %v315 = vld [vmem:[%s1 + $0xc4] sm:$0xf]
      %v316 = vld [vmem:[%s1 + $0xc8] sm:$0xf]
      %v317 = vld [vmem:[%s1 + $0xcc] sm:$0xf]
      %v318 = vld [vmem:[%s1 + $0xd0] sm:$0xf]
      %v319 = vld [vmem:[%s1 + $0xd4] sm:$0xf]
      %v320 = vld [vmem:[%s1 + $0xd8] sm:$0xf]
      %v321 = vld [vmem:[%s1 + $0xdc] sm:$0xf]
      %v322 = vld [vmem:[%s1 + $0xe0] sm:$0xf]
      %v323 = vld [vmem:[%s1 + $0xe4] sm:$0xf]
      %v324 = vld [vmem:[%s1 + $0xe8] sm:$0xf]
      %v325 = vld [vmem:[%s1 + $0xec] sm:$0xf]
      %v326 = vld [vmem:[%s1 + $0xf0] sm:$0xf]
      %v327 = vld [vmem:[%s1 + $0xf4] sm:$0xf]
      %v328 = vld [vmem:[%s1 + $0xf8] sm:$0xf]
      %v329 = vld [vmem:[%s1 + $0xfc] sm:$0xf]
      %v330 = vld [vmem:[%s1 + $0x100] sm:$0xf]
      %v331 = vld [vmem:[%s1 + $0x104] sm:$0xf]
      %v332 = vld [vmem:[%s1 + $0x108] sm:$0xf]
      %v333 = vld [vmem:[%s1 + $0x10c] sm:$0xf]
      %v334 = vld [vmem:[%s1 + $0x110] sm:$0xf]
      %v335 = vld [vmem:[%s1 + $0x114] sm:$0xf]
      %v336 = vld [vmem:[%s1 + $0x118] sm:$0xf]
      %v337 = vld [vmem:[%s1 + $0x11c] sm:$0xf]
      %v338 = vld [vmem:[%s1 + $0x120] sm:$0xf]
      %v339 = vld [vmem:[%s1 + $0x124] sm:$0xf]
      %v340 = vld [vmem:[%s1 + $0x128] sm:$0xf]
      %v341 = vld [vmem:[%s1 + $0x12c] sm:$0xf]
      %v342 = vld [vmem:[%s1 + $0x130] sm:$0xf]
      %v343 = vld [vmem:[%s1 + $0x134] sm:$0xf]
      %v344 = vld [vmem:[%s1 + $0x138] sm:$0xf]
      %v345 = vld [vmem:[%s1 + $0x13c] sm:$0xf]
      %v352 = vunpack.c.l.b16 %v260
      %v353 = vunpack.c.h.b16 %v260
      %v354 = vunpack.c.l.b16 %v261
      %v355 = vunpack.c.h.b16 %v261
      %v356 = vunpack.c.l.b16 %v262
      %v357 = vunpack.c.l.b16 %v263
      %v358 = vunpack.c.h.b16 %v263
      %v359 = vunpack.c.l.b16 %v264
      %v360 = vunpack.c.h.b16 %v264
      %v361 = vunpack.c.l.b16 %v265
      %v362 = vpack.c.b16 %v357, %v352
      %v363 = vpack.c.b16 %v358, %v353
      %v364 = vpack.c.b16 %v359, %v354
      %v365 = vpack.c.b16 %v360, %v355
      %v366 = vpack.c.b16 %v361, %v356
      %v452 = vunpack.c.l.b16 %v266
      %v453 = vunpack.c.l.b16 %v267
      %v454 = vunpack.c.l.b16 %v268
      %v455 = vunpack.c.l.b16 %v269
      %v456 = vunpack.c.l.b16 %v270
      %v457 = vunpack.c.l.b16 %v271
      %v458 = vunpack.c.l.b16 %v272
      %v459 = vunpack.c.l.b16 %v273
      %v460 = vunpack.c.l.b16 %v274
      %v461 = vunpack.c.l.b16 %v275
      %v462 = vunpack.c.l.b16 %v276
      %v463 = vunpack.c.l.b16 %v277
      %v464 = vunpack.c.l.b16 %v278
      %v465 = vunpack.c.l.b16 %v279
      %v466 = vunpack.c.l.b16 %v280
      %v467 = vunpack.c.l.b16 %v281
      %v468 = vunpack.c.l.b16 %v282
      %v469 = vunpack.c.l.b16 %v283
      %v470 = vunpack.c.l.b16 %v284
      %v471 = vunpack.c.l.b16 %v285
      %v472 = vunpack.c.l.b16 %v286
      %v473 = vunpack.c.l.b16 %v287
      %v474 = vunpack.c.l.b16 %v288
      %v475 = vunpack.c.l.b16 %v289
      %v476 = vunpack.c.l.b16 %v290
      %v477 = vunpack.c.l.b16 %v291
      %v478 = vunpack.c.l.b16 %v292
      %v479 = vunpack.c.l.b16 %v293
      %v480 = vunpack.c.l.b16 %v294
      %v481 = vunpack.c.l.b16 %v295
      %v482 = vunpack.c.l.b16 %v296
      %v483 = vunpack.c.l.b16 %v297
      %v484 = vunpack.c.l.b16 %v298
      %v485 = vunpack.c.l.b16 %v299
      %v486 = vunpack.c.l.b16 %v300
      %v487 = vunpack.c.l.b16 %v301
      %v488 = vunpack.c.l.b16 %v302
      %v489 = vunpack.c.l.b16 %v303
      %v490 = vunpack.c.l.b16 %v304
      %v491 = vunpack.c.l.b16 %v305
      %v492 = vunpack.c.l.b16 %v306
      %v493 = vunpack.c.l.b16 %v307
      %v494 = vunpack.c.l.b16 %v308
      %v495 = vunpack.c.l.b16 %v309
      %v496 = vunpack.c.l.b16 %v310
      %v497 = vunpack.c.l.b16 %v311
      %v498 = vunpack.c.l.b16 %v312
      %v499 = vunpack.c.l.b16 %v313
      %v500 = vunpack.c.l.b16 %v314
      %v501 = vunpack.c.l.b16 %v315
      %v502 = vunpack.c.l.b16 %v316
      %v503 = vunpack.c.l.b16 %v317
      %v504 = vunpack.c.l.b16 %v318
      %v505 = vunpack.c.l.b16 %v319
      %v506 = vunpack.c.l.b16 %v320
      %v507 = vunpack.c.l.b16 %v321
      %v508 = vunpack.c.l.b16 %v322
      %v509 = vunpack.c.l.b16 %v323
      %v510 = vunpack.c.l.b16 %v324
      %v511 = vunpack.c.l.b16 %v325
      %v512 = vunpack.c.l.b16 %v326
      %v513 = vunpack.c.l.b16 %v327
      %v514 = vunpack.c.l.b16 %v328
      %v515 = vunpack.c.l.b16 %v329
      %v516 = vunpack.c.l.b16 %v330
      %v517 = vunpack.c.l.b16 %v331
      %v518 = vunpack.c.l.b16 %v332
      %v519 = vunpack.c.l.b16 %v333
      %v520 = vunpack.c.l.b16 %v334
      %v521 = vunpack.c.l.b16 %v335
      %v522 = vunpack.c.l.b16 %v336
      %v523 = vunpack.c.l.b16 %v337
      %v524 = vunpack.c.l.b16 %v338
      %v525 = vunpack.c.l.b16 %v339
      %v526 = vunpack.c.l.b16 %v340
      %v527 = vunpack.c.l.b16 %v341
      %v528 = vunpack.c.l.b16 %v342
      %v529 = vunpack.c.l.b16 %v343
      %v530 = vunpack.c.l.b16 %v344
      %v531 = vunpack.c.l.b16 %v345
      %v532 = vpack.c.b16 %v453, %v452
      %v533 = vpack.c.b16 %v455, %v454
      %v534 = vpack.c.b16 %v457, %v456
      %v535 = vpack.c.b16 %v459, %v458
      %v536 = vpack.c.b16 %v461, %v460
      %v537 = vpack.c.b16 %v463, %v462
      %v538 = vpack.c.b16 %v465, %v464
      %v539 = vpack.c.b16 %v467, %v466
      %v540 = vpack.c.b16 %v469, %v468
      %v541 = vpack.c.b16 %v471, %v470
      %v542 = vpack.c.b16 %v473, %v472
      %v543 = vpack.c.b16 %v475, %v474
      %v544 = vpack.c.b16 %v477, %v476
      %v545 = vpack.c.b16 %v479, %v478
      %v546 = vpack.c.b16 %v481, %v480
      %v547 = vpack.c.b16 %v483, %v482
      %v548 = vpack.c.b16 %v485, %v484
      %v549 = vpack.c.b16 %v487, %v486
      %v550 = vpack.c.b16 %v489, %v488
      %v551 = vpack.c.b16 %v491, %v490
      %v552 = vpack.c.b16 %v493, %v492
      %v553 = vpack.c.b16 %v495, %v494
      %v554 = vpack.c.b16 %v497, %v496
      %v555 = vpack.c.b16 %v499, %v498
      %v556 = vpack.c.b16 %v501, %v500
      %v557 = vpack.c.b16 %v503, %v502
      %v558 = vpack.c.b16 %v505, %v504
      %v559 = vpack.c.b16 %v507, %v506
      %v560 = vpack.c.b16 %v509, %v508
      %v561 = vpack.c.b16 %v511, %v510
      %v562 = vpack.c.b16 %v513, %v512
      %v563 = vpack.c.b16 %v515, %v514
      %v564 = vpack.c.b16 %v517, %v516
      %v565 = vpack.c.b16 %v519, %v518
      %v566 = vpack.c.b16 %v521, %v520
      %v567 = vpack.c.b16 %v523, %v522
      %v568 = vpack.c.b16 %v525, %v524
      %v569 = vpack.c.b16 %v527, %v526
      %v570 = vpack.c.b16 %v529, %v528
      %v571 = vpack.c.b16 %v531, %v530
      %612 = vmatprep.subr.bf16.mxu0 0
      %613 = vmatpush1.bf16.msra.mxu0 %v532
      %614 = vmatprep.subr.bf16.mxu0 0
      %615 = vmatpush1.bf16.msra.mxu0 %v533
      %616 = vmatprep.subr.bf16.mxu0 0
      %617 = vmatpush1.bf16.msra.mxu0 %v534
      %618 = vmatprep.subr.bf16.mxu0 0
      %619 = vmatpush1.bf16.msra.mxu0 %v535
      %620 = vmatprep.subr.bf16.mxu0 0
      %621 = vmatpush1.bf16.msra.mxu0 %v536
      %622 = vmatprep.subr.bf16.mxu0 0
      %623 = vmatpush1.bf16.msra.mxu0 %v537
      %624 = vmatprep.subr.bf16.mxu0 0
      %625 = vmatpush1.bf16.msra.mxu0 %v538
      %626 = vmatprep.subr.bf16.mxu0 0
      %627 = vmatpush1.bf16.msra.mxu0 %v539
      %628 = vmatprep.subr.bf16.mxu0 0
      %629 = vmatpush1.bf16.msra.mxu0 %v540
      %630 = vmatprep.subr.bf16.mxu0 0
      %631 = vmatpush1.bf16.msra.mxu0 %v541
      %632 = vmatprep.subr.bf16.mxu0 0
      %633 = vmatpush1.bf16.msra.mxu0 %v542
      %634 = vmatprep.subr.bf16.mxu0 0
      %635 = vmatpush1.bf16.msra.mxu0 %v543
      %636 = vmatprep.subr.bf16.mxu0 0
      %637 = vmatpush1.bf16.msra.mxu0 %v544
      %638 = vmatprep.subr.bf16.mxu0 0
      %639 = vmatpush1.bf16.msra.mxu0 %v545
      %640 = vmatprep.subr.bf16.mxu0 0
      %641 = vmatpush1.bf16.msra.mxu0 %v546
      %642 = vmatprep.subr.bf16.mxu0 0
      %643 = vmatpush1.bf16.msra.mxu0 %v547
      %644 = vmatprep.mubr.bf16.mxu0 %v363
      %645 = vmatmul.mubr.bf16.gmra.mrb[0].mxu0 %v362
      %v646 = vpop.f32.mrb[0].mxu0
      %v647 = vadd.f32 0.0, %v646
      %v648 = vpop.f32.mrb[0].mxu0
      %v649 = vpop.f32.mrb[0].mxu0
      %v650 = vadd.f32 0.0, %v649
      %v651 = vpop.f32.mrb[0].mxu0
      %652 = vdwg.mxu0
      %653 = vmatprep.subr.bf16.mxu0 0
      %654 = vmatpush1.bf16.msra.mxu0 %v548
      %655 = vmatprep.subr.bf16.mxu0 0
      %656 = vmatpush1.bf16.msra.mxu0 %v549
      %657 = vmatprep.subr.bf16.mxu0 0
      %658 = vmatpush1.bf16.msra.mxu0 %v550
      %659 = vmatprep.subr.bf16.mxu0 0
      %660 = vmatpush1.bf16.msra.mxu0 %v551
      %661 = vmatprep.subr.bf16.mxu0 0
      %662 = vmatpush1.bf16.msra.mxu0 %v552
      %663 = vmatprep.subr.bf16.mxu0 0
      %664 = vmatpush1.bf16.msra.mxu0 %v553
      %665 = vmatprep.subr.bf16.mxu0 0
      %666 = vmatpush1.bf16.msra.mxu0 %v554
      %667 = vmatprep.subr.bf16.mxu0 0
      %668 = vmatpush1.bf16.msra.mxu0 %v555
      %669 = vmatprep.subr.bf16.mxu0 0
      %670 = vmatpush1.bf16.msra.mxu0 %v556
      %671 = vmatprep.subr.bf16.mxu0 0
      %672 = vmatpush1.bf16.msra.mxu0 %v557
      %673 = vmatprep.subr.bf16.mxu0 0
      %674 = vmatpush1.bf16.msra.mxu0 %v558
      %675 = vmatprep.subr.bf16.mxu0 0
      %676 = vmatpush1.bf16.msra.mxu0 %v559
      %677 = vmatprep.subr.bf16.mxu0 0
      %678 = vmatpush1.bf16.msra.mxu0 %v560
      %679 = vmatprep.subr.bf16.mxu0 0
      %680 = vmatpush1.bf16.msra.mxu0 %v561
      %681 = vmatprep.subr.bf16.mxu0 0
      %682 = vmatpush1.bf16.msra.mxu0 %v562
      %683 = vmatprep.subr.bf16.mxu0 0
      %684 = vmatpush1.bf16.msra.mxu0 %v563
      %685 = vmatprep.mubr.bf16.mxu0 %v365
      %686 = vmatmul.mubr.bf16.gmra.mrb[0].mxu0 %v364
      %v687 = vpop.f32.mrb[0].mxu0
      %v688 = vadd.f32 %v647, %v687
      %v689 = vpop.f32.mrb[0].mxu0
      %v690 = vpop.f32.mrb[0].mxu0
      %v691 = vadd.f32 %v650, %v690
      %v692 = vpop.f32.mrb[0].mxu0
      %693 = vdwg.mxu0
      %694 = vmatprep.subr.bf16.mxu0 0
      %695 = vmatpush1.bf16.msra.mxu0 %v564
      %696 = vmatprep.subr.bf16.mxu0 0
      %697 = vmatpush1.bf16.msra.mxu0 %v565
      %698 = vmatprep.subr.bf16.mxu0 0
      %699 = vmatpush1.bf16.msra.mxu0 %v566
      %700 = vmatprep.subr.bf16.mxu0 0
      %701 = vmatpush1.bf16.msra.mxu0 %v567
      %702 = vmatprep.subr.bf16.mxu0 0
      %703 = vmatpush1.bf16.msra.mxu0 %v568
      %704 = vmatprep.subr.bf16.mxu0 0
      %705 = vmatpush1.bf16.msra.mxu0 %v569
      %706 = vmatprep.subr.bf16.mxu0 0
      %707 = vmatpush1.bf16.msra.mxu0 %v570
      %708 = vmatprep.subr.bf16.mxu0 0
      %709 = vmatpush1.bf16.msra.mxu0 %v571
      %710 = vmatprep.subr.bf16.mxu0 0
      %711 = vmatpush1.bf16.msra.mxu0 0
      %712 = vmatprep.subr.bf16.mxu0 0
      %713 = vmatpush1.bf16.msra.mxu0 0
      %714 = vmatprep.subr.bf16.mxu0 0
      %715 = vmatpush1.bf16.msra.mxu0 0
      %716 = vmatprep.subr.bf16.mxu0 0
      %717 = vmatpush1.bf16.msra.mxu0 0
      %718 = vmatprep.subr.bf16.mxu0 0
      %719 = vmatpush1.bf16.msra.mxu0 0
      %720 = vmatprep.subr.bf16.mxu0 0
      %721 = vmatpush1.bf16.msra.mxu0 0
      %722 = vmatprep.subr.bf16.mxu0 0
      %723 = vmatpush1.bf16.msra.mxu0 0
      %724 = vmatprep.subr.bf16.mxu0 0
      %725 = vmatpush1.bf16.msra.mxu0 0
      %726 = vmatprep.mubr.bf16.mxu0 0
      %727 = vmatmul.mubr.bf16.gmra.mrb[0].mxu0 %v366
      %v728 = vpop.f32.mrb[0].mxu0
      %v729 = vadd.f32 %v688, %v728
      %v730 = vpop.f32.mrb[0].mxu0
      %v731 = vpop.f32.mrb[0].mxu0
      %v732 = vadd.f32 %v691, %v731
      %v733 = vpop.f32.mrb[0].mxu0
      %734 = vdwg.mxu0
      %v735 = vadd.f32 %v729, %v732
      %736 = vst [vmem:[%s258] sm:$0xff] %v735
      %v737 = vpack.c.bf16 %v732, %v729
      %v738 = vld [vmem:[%s2] sm:$0xff]
      %v739 = vld [vmem:[%s2 + $0x8] sm:$0xff]
      %v740 = vld [vmem:[%s2 + $0x10] sm:$0xff]
      %v741 = vld [vmem:[%s2 + $0x18] sm:$0xff]
      %v742 = vld [vmem:[%s2 + $0x20] sm:$0xff]
      %v743 = vld [vmem:[%s2 + $0x28] sm:$0xff]
      %v744 = vld [vmem:[%s2 + $0x30] sm:$0xff]
      %v745 = vld [vmem:[%s2 + $0x38] sm:$0xff]
      %v746 = vld [vmem:[%s2 + $0x40] sm:$0xff]
      %v747 = vld [vmem:[%s2 + $0x48] sm:$0xff]
      %v748 = vld [vmem:[%s2 + $0x50] sm:$0xff]
      %v749 = vld [vmem:[%s2 + $0x58] sm:$0xff]
      %v750 = vld [vmem:[%s2 + $0x60] sm:$0xff]
      %v751 = vld [vmem:[%s2 + $0x68] sm:$0xff]
      %v752 = vld [vmem:[%s2 + $0x70] sm:$0xff]
      %v753 = vld [vmem:[%s2 + $0x78] sm:$0xff]
      %v754 = vld [vmem:[%s2 + $0x80] sm:$0xff]
      %v755 = vld [vmem:[%s2 + $0x88] sm:$0xff]
      %v756 = vld [vmem:[%s2 + $0x90] sm:$0xff]
      %v757 = vld [vmem:[%s2 + $0x98] sm:$0xff]
      %v758 = vld [vmem:[%s2 + $0xa0] sm:$0xff]
      %v759 = vld [vmem:[%s2 + $0xa8] sm:$0xff]
      %v760 = vld [vmem:[%s2 + $0xb0] sm:$0xff]
      %v761 = vld [vmem:[%s2 + $0xb8] sm:$0xff]
      %v762 = vld [vmem:[%s2 + $0xc0] sm:$0xff]
      %v763 = vld [vmem:[%s2 + $0xc8] sm:$0xff]
      %v764 = vld [vmem:[%s2 + $0xd0] sm:$0xff]
      %v765 = vld [vmem:[%s2 + $0xd8] sm:$0xff]
      %v766 = vld [vmem:[%s2 + $0xe0] sm:$0xff]
      %v767 = vld [vmem:[%s2 + $0xe8] sm:$0xff]
      %v768 = vld [vmem:[%s2 + $0xf0] sm:$0xff]
      %v769 = vld [vmem:[%s2 + $0xf8] sm:$0xff]
      %v802 = vunpack.c.l.b16 %v738
      %v803 = vunpack.c.h.b16 %v738
      %v804 = vunpack.c.l.b16 %v739
      %v805 = vunpack.c.h.b16 %v739
      %v806 = vunpack.c.l.b16 %v740
      %v807 = vunpack.c.h.b16 %v740
      %v808 = vunpack.c.l.b16 %v741
      %v809 = vunpack.c.h.b16 %v741
      %v810 = vunpack.c.l.b16 %v742
      %v811 = vunpack.c.h.b16 %v742
      %v812 = vunpack.c.l.b16 %v743
      %v813 = vunpack.c.h.b16 %v743
      %v814 = vunpack.c.l.b16 %v744
      %v815 = vunpack.c.h.b16 %v744
      %v816 = vunpack.c.l.b16 %v745
      %v817 = vunpack.c.h.b16 %v745
      %v818 = vunpack.c.l.b16 %v746
      %v819 = vunpack.c.h.b16 %v746
      %v820 = vunpack.c.l.b16 %v747
      %v821 = vunpack.c.h.b16 %v747
      %v822 = vunpack.c.l.b16 %v748
      %v823 = vunpack.c.h.b16 %v748
      %v824 = vunpack.c.l.b16 %v749
      %v825 = vunpack.c.h.b16 %v749
      %v826 = vunpack.c.l.b16 %v750
      %v827 = vunpack.c.h.b16 %v750
      %v828 = vunpack.c.l.b16 %v751
      %v829 = vunpack.c.h.b16 %v751
      %v830 = vunpack.c.l.b16 %v752
      %v831 = vunpack.c.h.b16 %v752
      %v832 = vunpack.c.l.b16 %v753
      %v833 = vunpack.c.h.b16 %v753
      %v834 = vunpack.c.l.b16 %v754
      %v835 = vunpack.c.h.b16 %v754
      %v836 = vunpack.c.l.b16 %v755
      %v837 = vunpack.c.h.b16 %v755
      %v838 = vunpack.c.l.b16 %v756
      %v839 = vunpack.c.h.b16 %v756
      %v840 = vunpack.c.l.b16 %v757
      %v841 = vunpack.c.h.b16 %v757
      %v842 = vunpack.c.l.b16 %v758
      %v843 = vunpack.c.h.b16 %v758
      %v844 = vunpack.c.l.b16 %v759
      %v845 = vunpack.c.h.b16 %v759
      %v846 = vunpack.c.l.b16 %v760
      %v847 = vunpack.c.h.b16 %v760
      %v848 = vunpack.c.l.b16 %v761
      %v849 = vunpack.c.h.b16 %v761
      %v850 = vunpack.c.l.b16 %v762
      %v851 = vunpack.c.h.b16 %v762
      %v852 = vunpack.c.l.b16 %v763
      %v853 = vunpack.c.h.b16 %v763
      %v854 = vunpack.c.l.b16 %v764
      %v855 = vunpack.c.h.b16 %v764
      %v856 = vunpack.c.l.b16 %v765
      %v857 = vunpack.c.h.b16 %v765
      %v858 = vunpack.c.l.b16 %v766
      %v859 = vunpack.c.h.b16 %v766
      %v860 = vunpack.c.l.b16 %v767
      %v861 = vunpack.c.h.b16 %v767
      %v862 = vunpack.c.l.b16 %v768
      %v863 = vunpack.c.h.b16 %v768
      %v864 = vunpack.c.l.b16 %v769
      %v865 = vunpack.c.h.b16 %v769
      %v866 = vpack.c.b16 %v806, %v802
      %v867 = vpack.c.b16 %v807, %v803
      %v868 = vpack.c.b16 %v808, %v804
      %v869 = vpack.c.b16 %v809, %v805
      %v870 = vpack.c.b16 %v814, %v810
      %v871 = vpack.c.b16 %v815, %v811
      %v872 = vpack.c.b16 %v816, %v812
      %v873 = vpack.c.b16 %v817, %v813
      %v874 = vpack.c.b16 %v822, %v818
      %v875 = vpack.c.b16 %v823, %v819
      %v876 = vpack.c.b16 %v824, %v820
      %v877 = vpack.c.b16 %v825, %v821
      %v878 = vpack.c.b16 %v830, %v826
      %v879 = vpack.c.b16 %v831, %v827
      %v880 = vpack.c.b16 %v832, %v828
      %v881 = vpack.c.b16 %v833, %v829
      %v882 = vpack.c.b16 %v838, %v834
      %v883 = vpack.c.b16 %v839, %v835
      %v884 = vpack.c.b16 %v840, %v836
      %v885 = vpack.c.b16 %v841, %v837
      %v886 = vpack.c.b16 %v846, %v842
      %v887 = vpack.c.b16 %v847, %v843
      %v888 = vpack.c.b16 %v848, %v844
      %v889 = vpack.c.b16 %v849, %v845
      %v890 = vpack.c.b16 %v854, %v850
      %v891 = vpack.c.b16 %v855, %v851
      %v892 = vpack.c.b16 %v856, %v852
      %v893 = vpack.c.b16 %v857, %v853
      %v894 = vpack.c.b16 %v862, %v858
      %v895 = vpack.c.b16 %v863, %v859
      %v896 = vpack.c.b16 %v864, %v860
      %v897 = vpack.c.b16 %v865, %v861
      %930 = vmatprep.subr.bf16.mxu0 %v867
      %931 = vmatpush1.bf16.msra.mxu0 %v866
      %932 = vmatprep.subr.bf16.mxu0 %v871
      %933 = vmatpush1.bf16.msra.mxu0 %v870
      %934 = vmatprep.subr.bf16.mxu0 %v875
      %935 = vmatpush1.bf16.msra.mxu0 %v874
      %936 = vmatprep.subr.bf16.mxu0 %v879
      %937 = vmatpush1.bf16.msra.mxu0 %v878
      %938 = vmatprep.subr.bf16.mxu0 %v883
      %939 = vmatpush1.bf16.msra.mxu0 %v882
      %940 = vmatprep.subr.bf16.mxu0 %v887
      %941 = vmatpush1.bf16.msra.mxu0 %v886
      %942 = vmatprep.subr.bf16.mxu0 %v891
      %943 = vmatpush1.bf16.msra.mxu0 %v890
      %944 = vmatprep.subr.bf16.mxu0 %v895
      %945 = vmatpush1.bf16.msra.mxu0 %v894
      %946 = vmatprep.subr.bf16.mxu0 0
      %947 = vmatpush1.bf16.msra.mxu0 0
      %948 = vmatprep.subr.bf16.mxu0 0
      %949 = vmatpush1.bf16.msra.mxu0 0
      %950 = vmatprep.subr.bf16.mxu0 0
      %951 = vmatpush1.bf16.msra.mxu0 0
      %952 = vmatprep.subr.bf16.mxu0 0
      %953 = vmatpush1.bf16.msra.mxu0 0
      %954 = vmatprep.subr.bf16.mxu0 0
      %955 = vmatpush1.bf16.msra.mxu0 0
      %956 = vmatprep.subr.bf16.mxu0 0
      %957 = vmatpush1.bf16.msra.mxu0 0
      %958 = vmatprep.subr.bf16.mxu0 0
      %959 = vmatpush1.bf16.msra.mxu0 0
      %960 = vmatprep.subr.bf16.mxu0 0
      %961 = vmatpush1.bf16.msra.mxu0 0
      %962 = vmatprep.mubr.bf16.mxu0 0
      %963 = vmatmul.mubr.bf16.gmra.mrb[0].mxu0 %v737
      %v964 = vpop.f32.mrb[0].mxu0
      %v965 = vadd.f32 0.0, %v964
      %v966 = vpop.f32.mrb[0].mxu0
      %v967 = vadd.f32 0.0, %v966
      %v968 = vpop.f32.mrb[0].mxu0
      %v969 = vadd.f32 0.0, %v968
      %v970 = vpop.f32.mrb[0].mxu0
      %v971 = vadd.f32 0.0, %v970
      %972 = vdwg.mxu0
      %973 = vmatprep.subr.bf16.mxu0 %v869
      %974 = vmatpush1.bf16.msra.mxu0 %v868
      %975 = vmatprep.subr.bf16.mxu0 %v873
      %976 = vmatpush1.bf16.msra.mxu0 %v872
      %977 = vmatprep.subr.bf16.mxu0 %v877
      %978 = vmatpush1.bf16.msra.mxu0 %v876
      %979 = vmatprep.subr.bf16.mxu0 %v881
      %980 = vmatpush1.bf16.msra.mxu0 %v880
      %981 = vmatprep.subr.bf16.mxu0 %v885
      %982 = vmatpush1.bf16.msra.mxu0 %v884
      %983 = vmatprep.subr.bf16.mxu0 %v889
      %984 = vmatpush1.bf16.msra.mxu0 %v888
      %985 = vmatprep.subr.bf16.mxu0 %v893
      %986 = vmatpush1.bf16.msra.mxu0 %v892
      %987 = vmatprep.subr.bf16.mxu0 %v897
      %988 = vmatpush1.bf16.msra.mxu0 %v896
      %989 = vmatprep.subr.bf16.mxu0 0
      %990 = vmatpush1.bf16.msra.mxu0 0
      %991 = vmatprep.subr.bf16.mxu0 0
      %992 = vmatpush1.bf16.msra.mxu0 0
      %993 = vmatprep.subr.bf16.mxu0 0
      %994 = vmatpush1.bf16.msra.mxu0 0
      %995 = vmatprep.subr.bf16.mxu0 0
      %996 = vmatpush1.bf16.msra.mxu0 0
      %997 = vmatprep.subr.bf16.mxu0 0
      %998 = vmatpush1.bf16.msra.mxu0 0
      %999 = vmatprep.subr.bf16.mxu0 0
      %1000 = vmatpush1.bf16.msra.mxu0 0
      %1001 = vmatprep.subr.bf16.mxu0 0
      %1002 = vmatpush1.bf16.msra.mxu0 0
      %1003 = vmatprep.subr.bf16.mxu0 0
      %1004 = vmatpush1.bf16.msra.mxu0 0
      %1005 = vmatprep.mubr.bf16.mxu0 0
      %1006 = vmatmul.mubr.bf16.gmra.mrb[0].mxu0 %v737
      %v1007 = vpop.f32.mrb[0].mxu0
      %v1008 = vadd.f32 0.0, %v1007
      %v1009 = vpop.f32.mrb[0].mxu0
      %v1010 = vadd.f32 0.0, %v1009
      %v1011 = vpop.f32.mrb[0].mxu0
      %v1012 = vadd.f32 0.0, %v1011
      %v1013 = vpop.f32.mrb[0].mxu0
      %v1014 = vadd.f32 0.0, %v1013
      %1015 = vdwg.mxu0
      %v1016 = vsub.f32 0.0, %v965
      %v1017 = vsub.f32 0.0, %v967
      %v1018 = vsub.f32 0.0, %v1008
      %v1019 = vsub.f32 0.0, %v1010
      %v1020 = vsub.f32 0.0, %v969
      %v1021 = vsub.f32 0.0, %v971
      %v1022 = vsub.f32 0.0, %v1012
      %v1023 = vsub.f32 0.0, %v1014
      %v1024 = vmul.f32 %v1016, 1.442695
      %v1025 = vpow.pop %v1024
      %v1026 = vmul.f32 %v1017, 1.442695
      %v1027 = vpow.pop %v1026
      %v1028 = vmul.f32 %v1018, 1.442695
      %v1029 = vpow.pop %v1028
      %v1030 = vmul.f32 %v1019, 1.442695
      %v1031 = vpow.pop %v1030
      %v1032 = vmul.f32 %v1020, 1.442695
      %v1033 = vpow.pop %v1032
      %v1034 = vmul.f32 %v1021, 1.442695
      %v1035 = vpow.pop %v1034
      %v1036 = vmul.f32 %v1022, 1.442695
      %v1037 = vpow.pop %v1036
      %v1038 = vmul.f32 %v1023, 1.442695
      %v1039 = vpow.pop %v1038
      %v1040 = vmul.f32 %v1025, 10.0
      %v1041 = vmul.f32 %v1027, 10.0
      %v1042 = vmul.f32 %v1033, 10.0
      %v1043 = vmul.f32 %v1035, 10.0
      %1044 = vst [vmem:[%s246] sm:$0xff] %v1040
      %1045 = vst [vmem:[%s246 + $0x8] sm:$0xff] %v1041
      %1046 = vst [vmem:[%s246 + $0x10] sm:$0xff] %v1042
      %1047 = vst [vmem:[%s246 + $0x18] sm:$0xff] %v1043
      %v1048 = vadd.f32 %v1029, 1.0
      %v1049 = vadd.f32 %v1031, 1.0
      %v1050 = vadd.f32 %v1037, 1.0
      %v1051 = vadd.f32 %v1039, 1.0
      %v1052 = vrcp.pop %v1048
      %v1053 = vrcp.pop %v1049
      %v1054 = vrcp.pop %v1050
      %v1055 = vrcp.pop %v1051
      %v1056 = vpack.c.bf16 %v1054, %v1052
      %v1057 = vpack.c.bf16 %v1055, %v1053
      %v1060 = vunpack.c.l.b16 %v1056
      %v1061 = vunpack.c.l.b16 %v1057
      %v1062 = vunpack.c.h.b16 %v1056
      %v1063 = vunpack.c.h.b16 %v1057
      %v1064 = vpack.c.b16 %v1061, %v1060
      %v1065 = vpack.c.b16 %v1063, %v1062
      %1068 = vst [vmem:[%s253] sm:$0xff] %v1064
      %1069 = vst [vmem:[%s253 + $0x8] sm:$0xff] %v1065
      %s1070 = smul.u32 2, %s17
      %p1071 = scmp.lt.s32.totalorder %s1070, 3
      %s1072 = scalar_select %p1071, %s1070, 3
      %s1073 = smul.addr %s1072, 2
      %s1074 = smul.addr %s1073, 8
      %s1075 = scalar_lea.vmem %s3, %s1074
      %s1076 = smul.u32 2, %s17
      %p1077 = scmp.lt.s32.totalorder %s1076, 3
      %s1078 = scalar_select %p1077, %s1076, 3
      %s1079 = smul.addr %s1078, 2
      %s1080 = smul.addr %s1079, 4
      %s1081 = scalar_lea.vmem %s4, %s1080
      %p1082 = scmp.lt.s32.totalorder %s17, 1
      %s1083 = scalar_select %p1082, %s17, 1
      %s1084 = smul.addr %s1083, 8
      %s1085 = scalar_lea.vmem %s5, %s1084
      // Predicated region
      $region33: #{_unidepth_pipeline.1} parent=31 // pred_check
        %p1086 = pneg %p103
      $region34: #{_unidepth_pipeline.1} parent=31 // pred_check_branch
        %1088 = sbr.rel (%p1086) target = $region36
      $region35: #{_unidepth_pipeline.1} parent=31 // pred_region
        %s1089 = smul.u32 2, %s17
      $region36: #{_unidepth_pipeline.1} parent=31 // pred_fallthru
        _
      // Predicated region
      $region37: #{_unidepth_pipeline.1} parent=31 // pred_check
        %p1090 = pneg %p129
      $region38: #{_unidepth_pipeline.1} parent=31 // pred_check_branch
        %1092 = sbr.rel (%p1090) target = $region40
      $region39: #{_unidepth_pipeline.1} parent=31 // pred_region
        %s1093 = smul.u32 2, %s17
      $region40: #{_unidepth_pipeline.1} parent=31 // pred_fallthru
        _
      // Predicated region
      $region41: #{_unidepth_pipeline.1} parent=31 // pred_check
        %p1094 = pneg %p155
      $region42: #{_unidepth_pipeline.1} parent=31 // pred_check_branch
        %1096 = sbr.rel (%p1094) target = $region44
      $region43: #{_unidepth_pipeline.1} parent=31 // pred_region
        _
      $region44: #{_unidepth_pipeline.1} parent=31 // pred_fallthru
        _
    $region32: #{_unidepth_pipeline.1} parent=5 // pred_fallthru
      _
    %p1097 = scmp.le.s32.totalorder 2, %s12
    // Predicated region
    $region45: #{_unidepth_pipeline.1} parent=5 // pred_check
      %p1098 = pneg %p1097
    $region46: #{_unidepth_pipeline.1} parent=5 // pred_check_branch
      %1100 = sbr.rel (%p1098) target = $region48
    $region47: #{_unidepth_pipeline.1} parent=5 // pred_region
      %s1101 = ssub.s32 %s12, 2
      // Predicated region
      $region49: #{_unidepth_pipeline.1} parent=47 // pred_check
        %p1102 = pneg %p109
      $region50: #{_unidepth_pipeline.1} parent=47 // pred_check_branch
        %1104 = sbr.rel (%p1102) target = $region52
      $region51: #{_unidepth_pipeline.1} parent=47 // pred_region
        %s1105 = smul.u32 2, %s18
        %p1106 = scmp.lt.s32.totalorder %s1105, 3
        %s1107 = scalar_select %p1106, %s1105, 3
        %s1108 = smul.addr %s1107, 2
        %s1109 = smul.addr %s1108, 8
        %s1110 = scalar_lea.vmem %s3, %s1109
      $region52: #{_unidepth_pipeline.1} parent=47 // pred_fallthru
        _
      // Predicated region
      $region53: #{_unidepth_pipeline.1} parent=47 // pred_check
        %p1111 = pneg %p135
      $region54: #{_unidepth_pipeline.1} parent=47 // pred_check_branch
        %1113 = sbr.rel (%p1111) target = $region56
      $region55: #{_unidepth_pipeline.1} parent=47 // pred_region
        %s1114 = smul.u32 2, %s18
        %p1115 = scmp.lt.s32.totalorder %s1114, 3
        %s1116 = scalar_select %p1115, %s1114, 3
        %s1117 = smul.addr %s1116, 2
        %s1118 = smul.addr %s1117, 4
        %s1119 = scalar_lea.vmem %s4, %s1118
      $region56: #{_unidepth_pipeline.1} parent=47 // pred_fallthru
        _
      // Predicated region
      $region57: #{_unidepth_pipeline.1} parent=47 // pred_check
        %p1120 = pneg %p161
      $region58: #{_unidepth_pipeline.1} parent=47 // pred_check_branch
        %1122 = sbr.rel (%p1120) target = $region60
      $region59: #{_unidepth_pipeline.1} parent=47 // pred_region
        %p1123 = scmp.lt.s32.totalorder %s18, 1
        %s1124 = scalar_select %p1123, %s18, 1
        %s1125 = smul.addr %s1124, 8
        %s1126 = scalar_lea.vmem %s5, %s1125
      $region60: #{_unidepth_pipeline.1} parent=47 // pred_fallthru
        _
    $region48: #{_unidepth_pipeline.1} parent=5 // pred_fallthru
      _
  $region6: #{_unidepth_pipeline.1} parent=0 // loop_footer
    %s16 = sadd.s32 1, %s12
  $region7: #{_unidepth_pipeline.1} parent=0 // loop_footer_branch
    %11 = sbr.rel target = $region3
  $region8: #{_unidepth_pipeline.1} parent=0 // loop_exit
    _

</llo_original>
